<compile_context>
chip_gen: v6e
topology: v6e:2x2x1
jax: 0.10.0
libtpu: 0.0.40
codegen_flags: <defaults>
</compile_context>

<pallas_src>
import functools

import jax
import jax.numpy as jnp
from jax import lax
from jax.experimental import pallas as pl
from jax.experimental.pallas import tpu as pltpu

_EPS = 1e-5


def _round_up(n, m):
    return -(-n // m) * m


def _pick_batch_block(B, Lout, row_target=512):
    """Largest divisor of B whose flattened row count bb*Lout stays <= row_target."""
    # TODO(synk): on v7x prefer a choice that keeps the parallel grid extent >= 2 so
    #             both TensorCores get work once shapes are big enough to matter.
    bb = 1
    for d in range(1, B + 1):
        if B % d == 0 and d * Lout <= row_target:
            bb = d
    return bb


# ---------------------------------------------------------------------------
# Pass 1: fused ConvTranspose1d(k=2,s=2) + channel-concat(skip) + Conv1d(2C->C, K)
#          + per-block partial BN statistics.  Grid = (B//bb,), "parallel".
# ---------------------------------------------------------------------------
def _tconv_conv1_kernel(K, pad,
                        x_ref, skip_ref, wtc_ref, btc_ref, w1_ref, b1_ref,
                        h1_ref, st1_ref, zpad_ref):
    # x_ref    (bb, Lout, Cin)   row-duplicated input (row q holds x[q // 2])
    # skip_ref (bb, Lout, Cin)
    # wtc_ref  (Cin, 2*Cin)      [W_tap0 | W_tap1]             (compute dtype)
    # btc_ref  (1, 2*Cin)        tconv bias, duplicated        (f32)
    # w1_ref   (K*2*Cin, Cmid)   im2col-packed conv1 weight    (compute dtype)
    # b1_ref   (1, Cmid)
    # h1_ref   (bb, Lout, Cmid)  pre-BN conv1 output           (activation dtype)
    # st1_ref  (8, Cmid)         row0 = sum, row1 = sum of squares (f32)
    # zpad_ref (bb, Lp, 2*Cin)   scratch: per-batch zero-padded [x_up | skip]
    bb, Lout, Cin = x_ref.shape
    Cmid = w1_ref.shape[1]
    cdt = w1_ref.dtype
    M = bb * Lout

    # --- ConvTranspose1d: one fused matmul for both taps; even/odd rows pick tap 0/1.
    xr = x_ref[...].reshape(M, Cin).astype(cdt)
    u = jnp.dot(xr, wtc_ref[...], preferred_element_type=jnp.float32) + btc_ref[...]
    even = (lax.broadcasted_iota(jnp.int32, (M, Cin), 0) % 2) == 0
    x_up = jnp.where(even, u[:, :Cin], u[:, Cin:])                     # (M, Cin) f32

    # --- padded [x_up | skip] slab lives only in VMEM; zero only pad/tail rows.
    if pad > 0:
        zpad_ref[:, 0:pad, :] = jnp.zeros((bb, pad, 2 * Cin), zpad_ref.dtype)
    tail = zpad_ref.shape[1] - (pad + Lout)
    if tail > 0:
        zpad_ref[:, pad + Lout:, :] = jnp.zeros((bb, tail, 2 * Cin), zpad_ref.dtype)
    zpad_ref[:, pad:pad + Lout, 0:Cin] = x_up.reshape(bb, Lout, Cin).astype(zpad_ref.dtype)
    zpad_ref[:, pad:pad + Lout, Cin:2 * Cin] = skip_ref[...].astype(zpad_ref.dtype)

    # --- Conv1d(2*Cin -> Cmid, K): ONE matmul via im2col over the K taps.
    # TODO(synk): K sublane-offset slices could become pltpu.roll-shifted accumulated
    #             matmuls in the length-on-lanes orientation.
    zcat = jnp.concatenate([zpad_ref[:, k:k + Lout, :] for k in range(K)], axis=-1)
    h1 = jnp.dot(zcat.reshape(M, K * 2 * Cin), w1_ref[...],
                 preferred_element_type=jnp.float32) + b1_ref[...]
    h1_ref[...] = h1.reshape(bb, Lout, Cmid).astype(h1_ref.dtype)

    # --- partial BN1 statistics from the f32 accumulator (finalized in the wrapper).
    s = jnp.sum(h1, axis=0, keepdims=True)
    sq = jnp.sum(h1 * h1, axis=0, keepdims=True)
    st1_ref[...] = jnp.concatenate([s, sq, jnp.zeros((6, Cmid), jnp.float32)], axis=0)


# ---------------------------------------------------------------------------
# Pass 2: BN1 (precomputed scale/shift) + ReLU + Conv1d(C->Cout, K) + partial BN2 stats.
# ---------------------------------------------------------------------------
def _bn_relu_conv2_kernel(K, pad,
                          h1_ref, sc1_ref, sh1_ref, w2_ref, b2_ref,
                          h2_ref, st2_ref, hpad_ref):
    bb, Lout, Cmid = h1_ref.shape
    Cout = w2_ref.shape[1]
    M = bb * Lout

    # BN1 + ReLU using precomputed (1, Cmid) scale/shift (f32).
    h = jnp.maximum(h1_ref[...].astype(jnp.float32) * sc1_ref[...] + sh1_ref[...], 0.0)

    if pad > 0:
        hpad_ref[:, 0:pad, :] = jnp.zeros((bb, pad, Cmid), hpad_ref.dtype)
    tail = hpad_ref.shape[1] - (pad + Lout)
    if tail > 0:
        hpad_ref[:, pad + Lout:, :] = jnp.zeros((bb, tail, Cmid), hpad_ref.dtype)
    hpad_ref[:, pad:pad + Lout, :] = h.astype(hpad_ref.dtype)

    hcat = jnp.concatenate([hpad_ref[:, k:k + Lout, :] for k in range(K)], axis=-1)
    h2 = jnp.dot(hcat.reshape(M, K * Cmid), w2_ref[...],
                 preferred_element_type=jnp.float32) + b2_ref[...]
    h2_ref[...] = h2.reshape(bb, Lout, Cout).astype(h2_ref.dtype)

    s = jnp.sum(h2, axis=0, keepdims=True)
    sq = jnp.sum(h2 * h2, axis=0, keepdims=True)
    st2_ref[...] = jnp.concatenate([s, sq, jnp.zeros((6, Cout), jnp.float32)], axis=0)


# ---------------------------------------------------------------------------
# Pass 3: BN2 (precomputed scale/shift) + ReLU (elementwise).
# ---------------------------------------------------------------------------
def _bn_relu_kernel(h2_ref, sc2_ref, sh2_ref, o_ref):
    o_ref[...] = jnp.maximum(
        h2_ref[...].astype(jnp.float32) * sc2_ref[...] + sh2_ref[...], 0.0
    ).astype(o_ref.dtype)


# ---------------------------------------------------------------------------
# BN finalization: tiny jnp reduce over the per-block partial stats (done once).
# ---------------------------------------------------------------------------
def _finalize_bn(st, gamma, beta, n_total):
    s1 = jnp.sum(st[:, 0, :], axis=0)
    s2 = jnp.sum(st[:, 1, :], axis=0)
    mean = s1 / n_total
    # TODO(synk): one-pass E[x^2]-E[x]^2 can cancel for large activation means; use a
    #             shifted-sum / Welford variant for production-scale activations.
    var = jnp.maximum(s2 / n_total - mean * mean, 0.0)
    scale = gamma.astype(jnp.float32) * lax.rsqrt(var + _EPS)
    shift = beta.astype(jnp.float32) - mean * scale
    C = st.shape[-1]
    return scale.reshape(1, C), shift.reshape(1, C)


# ---------------------------------------------------------------------------
# Wrapper: layout glue + weight repacking + the three pallas_calls.
# ---------------------------------------------------------------------------
def decoder_block_forward(x_ncl, skip_ncl, params, *,
                          compute_dtype=jnp.bfloat16, activation_dtype=None,
                          batch_rows_target=512):
    (wt, bt, w1, b1, g1, be1, w2, b2, g2, be2) = params
    B, Cin, Lin = x_ncl.shape
    Lout = 2 * Lin
    K = w1.shape[-1]
    pad = K // 2
    Cmid = w1.shape[0]
    Cout = w2.shape[0]
    cdt = compute_dtype
    adt = compute_dtype if activation_dtype is None else activation_dtype
    Lp_align = _round_up(Lout + 2 * pad, 8)          # sublane-aligned padded length

    bb = _pick_batch_block(B, Lout, batch_rows_target)
    nblk = B // bb
    grid = (nblk,)
    n_total = float(B * Lout)

    # ---- layout glue only (pure transposes / repeats; all math is in the kernels) ----
    x_rep = jnp.repeat(jnp.transpose(x_ncl, (0, 2, 1)), 2, axis=1)    # (B, Lout, Cin)
    skip_cl = jnp.transpose(skip_ncl, (0, 2, 1))                      # (B, Lout, Cin)

    # ---- host-side weight repacking (done once) ----
    wt_cat = jnp.concatenate([wt[:, :, 0], wt[:, :, 1]], axis=1).astype(cdt)   # (Cin, 2Cin)
    btc = jnp.concatenate([bt, bt]).reshape(1, 2 * Cin).astype(jnp.float32)
    w1_mat = jnp.transpose(w1, (2, 1, 0)).reshape(K * 2 * Cin, Cmid).astype(cdt)
    w2_mat = jnp.transpose(w2, (2, 1, 0)).reshape(K * Cmid, Cout).astype(cdt)

    cparams = pltpu.CompilerParams(dimension_semantics=("parallel",))

    # ---- pass 1: tconv + concat(skip) + conv1 (+ partial BN1 stats) ----
    h1, st1 = pl.pallas_call(
        functools.partial(_tconv_conv1_kernel, K, pad),
        grid=grid,
        in_specs=[
            pl.BlockSpec((bb, Lout, Cin), lambda b: (b, 0, 0)),       # x (row-duplicated)
            pl.BlockSpec((bb, Lout, Cin), lambda b: (b, 0, 0)),       # skip
            pl.BlockSpec((Cin, 2 * Cin), lambda b: (0, 0)),           # wt_cat
            pl.BlockSpec((1, 2 * Cin), lambda b: (0, 0)),             # btc
            pl.BlockSpec((K * 2 * Cin, Cmid), lambda b: (0, 0)),      # w1 (im2col)
            pl.BlockSpec((1, Cmid), lambda b: (0, 0)),                # b1
        ],
        out_specs=(
            pl.BlockSpec((bb, Lout, Cmid), lambda b: (b, 0, 0)),      # h1 (pre-BN)
            pl.BlockSpec((None, 8, Cmid), lambda b: (b, 0, 0)),       # partial stats
        ),
        out_shape=(jax.ShapeDtypeStruct((B, Lout, Cmid), adt),
                   jax.ShapeDtypeStruct((nblk, 8, Cmid), jnp.float32)),
        scratch_shapes=[pltpu.VMEM((bb, Lp_align, 2 * Cin), cdt)],
        compiler_params=cparams,
    )(x_rep, skip_cl, wt_cat, btc, w1_mat,
      b1.reshape(1, Cmid).astype(jnp.float32))

    sc1, sh1 = _finalize_bn(st1, g1, be1, n_total)                    # BN1 hoisted

    # ---- pass 2: BN1 + ReLU + conv2 (+ partial BN2 stats) ----
    h2, st2 = pl.pallas_call(
        functools.partial(_bn_relu_conv2_kernel, K, pad),
        grid=grid,
        in_specs=[
            pl.BlockSpec((bb, Lout, Cmid), lambda b: (b, 0, 0)),      # h1
            pl.BlockSpec((1, Cmid), lambda b: (0, 0)),                # scale1
            pl.BlockSpec((1, Cmid), lambda b: (0, 0)),                # shift1
            pl.BlockSpec((K * Cmid, Cout), lambda b: (0, 0)),         # w2 (im2col)
            pl.BlockSpec((1, Cout), lambda b: (0, 0)),                # b2
        ],
        out_specs=(
            pl.BlockSpec((bb, Lout, Cout), lambda b: (b, 0, 0)),      # h2 (pre-BN)
            pl.BlockSpec((None, 8, Cout), lambda b: (b, 0, 0)),       # partial stats
        ),
        out_shape=(jax.ShapeDtypeStruct((B, Lout, Cout), adt),
                   jax.ShapeDtypeStruct((nblk, 8, Cout), jnp.float32)),
        scratch_shapes=[pltpu.VMEM((bb, Lp_align, Cmid), cdt)],
        compiler_params=cparams,
    )(h1, sc1, sh1, w2_mat, b2.reshape(1, Cout).astype(jnp.float32))

    sc2, sh2 = _finalize_bn(st2, g2, be2, n_total)                    # BN2 hoisted

    # ---- pass 3: BN2 + ReLU ----
    out_cl = pl.pallas_call(
        _bn_relu_kernel,
        grid=grid,
        in_specs=[
            pl.BlockSpec((bb, Lout, Cout), lambda b: (b, 0, 0)),
            pl.BlockSpec((1, Cout), lambda b: (0, 0)),
            pl.BlockSpec((1, Cout), lambda b: (0, 0)),
        ],
        out_specs=pl.BlockSpec((bb, Lout, Cout), lambda b: (b, 0, 0)),
        out_shape=jax.ShapeDtypeStruct((B, Lout, Cout), jnp.float32),
        compiler_params=cparams,
    )(h2, sc2, sh2)

    return jnp.transpose(out_cl, (0, 2, 1))                           # back to NCL


# ---------------------------------------------------------------------------
# Deterministic parameter init (shapes follow the PyTorch module __init__)
# ---------------------------------------------------------------------------
def init_params(key, in_channels, out_channels, kernel_size):
    ks = jax.random.split(key, 10)
    wt = 0.2 * jax.random.normal(ks[0], (in_channels, in_channels, 2), jnp.float32)
    bt = 0.1 * jax.random.normal(ks[1], (in_channels,), jnp.float32)
    w1 = 0.2 * jax.random.normal(ks[2], (in_channels, in_channels * 2, kernel_size), jnp.float32)
    b1 = 0.1 * jax.random.normal(ks[3], (in_channels,), jnp.float32)
    g1 = 1.0 + 0.1 * jax.random.normal(ks[4], (in_channels,), jnp.float32)
    be1 = 0.1 * jax.random.normal(ks[5], (in_channels,), jnp.float32)
    w2 = 0.2 * jax.random.normal(ks[6], (out_channels, in_channels, kernel_size), jnp.float32)
    b2 = 0.1 * jax.random.normal(ks[7], (out_channels,), jnp.float32)
    g2 = 1.0 + 0.1 * jax.random.normal(ks[8], (out_channels,), jnp.float32)
    be2 = 0.1 * jax.random.normal(ks[9], (out_channels,), jnp.float32)
    return (wt, bt, w1, b1, g1, be1, w2, b2, g2, be2)


# ---------------------------------------------------------------------------
# Pure-JAX reference (NCL, matching PyTorch training-mode semantics) for a self-check
# ---------------------------------------------------------------------------
def ref_forward(x, skip, params, kernel_size):
    (wt, bt, w1, b1, g1, be1, w2, b2, g2, be2) = params
    B, C, L = x.shape
    pad = kernel_size // 2
    y = jnp.zeros((B, C, 2 * L), jnp.float32)
    y = y.at[:, :, 0::2].set(jnp.einsum('bct,cd->bdt', x, wt[:, :, 0]))
    y = y.at[:, :, 1::2].set(jnp.einsum('bct,cd->bdt', x, wt[:, :, 1]))
    y = y + bt[None, :, None]
    z = jnp.concatenate([y, skip], axis=1)

    def conv1d(h, w, b):
        o = lax.conv_general_dilated(h, w, (1,), [(pad, pad)],
                                     dimension_numbers=('NCH', 'OIH', 'NCH'))
        return o + b[None, :, None]

    def bn_relu(h, g, be):
        m = jnp.mean(h, axis=(0, 2), keepdims=True)
        v = jnp.mean((h - m) ** 2, axis=(0, 2), keepdims=True)
        h = (h - m) / jnp.sqrt(v + 1e-5) * g[None, :, None] + be[None, :, None]
        return jnp.maximum(h, 0.0)

    h = bn_relu(conv1d(z, w1, b1), g1, be1)
    return bn_relu(conv1d(h, w2, b2), g2, be2)


if __name__ == "__main__":
    key = jax.random.PRNGKey(0)
    B, Cin, Lin, Cout, K = 2, 8, 8, 4, 3
    kx, ks, kp = jax.random.split(key, 3)
    x = jax.random.normal(kx, (B, Cin, Lin), jnp.float32)            # NCL like PyTorch
    skip = jax.random.normal(ks, (B, Cin, 2 * Lin), jnp.float32)     # skip is twice as long
    params = init_params(kp, Cin, Cout, K)

    ref = jax.block_until_ready(ref_forward(x, skip, params, K))

    # f32 path (numerics reference: f32 matmuls and f32 inter-pass activations).
    out_f32 = jax.block_until_ready(
        decoder_block_forward(x, skip, params, compute_dtype=jnp.float32))
    assert out_f32.shape == (B, Cout, 2 * Lin), out_f32.shape
    err = float(jnp.max(jnp.abs(out_f32 - ref)))
    if err > 5e-3:
        raise AssertionError(f"f32 mismatch vs reference: max abs err = {err}")

    # Default bf16 MXU path (v5e/v6e/v7x): bf16 matmuls + bf16 inter-pass activations;
    # BN / ReLU / statistics stay f32.
    out_bf16 = jax.block_until_ready(decoder_block_forward(x, skip, params))
    err_bf16 = float(jnp.max(jnp.abs(out_bf16 - ref)))
    if not (err_bf16 < 2e-1):
        raise AssertionError(f"bf16 mismatch vs reference: max abs err = {err_bf16}")

    print("KERNEL_OK")
</pallas_src>

<mosaic_0001>
module attributes {stable_mosaic.version = 11 : i64} {
  func.func @_tconv_conv1_kernel(%arg0: i32, %arg1: memref<2x16x8xf32, #tpu.memory_space<vmem>>, %arg2: memref<2x16x8xf32, #tpu.memory_space<vmem>>, %arg3: memref<8x16xf32, #tpu.memory_space<vmem>>, %arg4: memref<1x16xf32, #tpu.memory_space<vmem>>, %arg5: memref<48x8xf32, #tpu.memory_space<vmem>>, %arg6: memref<1x8xf32, #tpu.memory_space<vmem>>, %arg7: memref<2x16x8xf32, #tpu.memory_space<vmem>>, %arg8: memref<1x8x8xf32, #tpu.memory_space<vmem>>, %arg9: memref<2x24x16xf32, #tpu.memory_space<vmem>>) attributes {dimension_semantics = [#tpu.dimension_semantics<parallel>], iteration_bounds = array<i64: 1>, scalar_prefetch = 0 : i64, scratch_operands = 1 : i64, tpu.core_type = #tpu.core_type<tc>, window_params = [{transform_indices = @transform_0, window_bounds = array<i64: 2, 16, 8>}, {transform_indices = @transform_1, window_bounds = array<i64: 2, 16, 8>}, {pipeline_mode = #tpu.pipeline_mode<synchronous>, transform_indices = @transform_2, window_bounds = array<i64: 8, 16>}, {pipeline_mode = #tpu.pipeline_mode<synchronous>, transform_indices = @transform_3, window_bounds = array<i64: 1, 16>}, {pipeline_mode = #tpu.pipeline_mode<synchronous>, transform_indices = @transform_4, window_bounds = array<i64: 48, 8>}, {pipeline_mode = #tpu.pipeline_mode<synchronous>, transform_indices = @transform_5, window_bounds = array<i64: 1, 8>}, {transform_indices = @transform_6, window_bounds = array<i64: 2, 16, 8>}, {transform_indices = @transform_7, window_bounds = array<i64: 1, 8, 8>}]} {
    %c0 = arith.constant 0 : index
    %c0_0 = arith.constant 0 : index
    %c0_1 = arith.constant 0 : index
    %0 = vector.load %arg1[%c0, %c0_0, %c0_1] : memref<2x16x8xf32, #tpu.memory_space<vmem>>, vector<2x16x8xf32>
    %1 = vector.shape_cast %0 : vector<2x16x8xf32> to vector<32x8xf32>
    %c0_2 = arith.constant 0 : index
    %c0_3 = arith.constant 0 : index
    %2 = vector.load %arg3[%c0_2, %c0_3] : memref<8x16xf32, #tpu.memory_space<vmem>>, vector<8x16xf32>
    %cst = arith.constant dense<0.000000e+00> : vector<32x16xf32>
    %3 = tpu.matmul %1, %2, %cst {dimension_numbers = #tpu.dot_dimension_numbers<[1], [0], [0], [1], [0, 0, 1, 1], [], []>} : vector<32x8xf32>, vector<8x16xf32>, vector<32x16xf32> -> vector<32x16xf32>
    %c0_4 = arith.constant 0 : index
    %c0_5 = arith.constant 0 : index
    %4 = vector.load %arg4[%c0_4, %c0_5] : memref<1x16xf32, #tpu.memory_space<vmem>>, vector<1x16xf32>
    %5 = vector.broadcast %4 : vector<1x16xf32> to vector<32x16xf32>
    %6 = arith.addf %3, %5 : vector<32x16xf32>
    %7 = tpu.iota {dimensions = array<i32: 0>} : vector<32x8xi32>
    %c2_i32 = arith.constant 2 : i32
    %c0_i32 = arith.constant 0 : i32
    %8 = arith.cmpi eq, %c2_i32, %c0_i32 : i32
    %c1_i32 = arith.constant 1 : i32
    %9 = arith.select %8, %c1_i32, %c2_i32 : i32
    %10 = vector.broadcast %9 : i32 to vector<32x8xi32>
    %11 = arith.remsi %7, %10 : vector<32x8xi32>
    %c0_i32_6 = arith.constant 0 : i32
    %12 = vector.broadcast %c0_i32_6 : i32 to vector<32x8xi32>
    %13 = arith.cmpi ne, %11, %12 : vector<32x8xi32>
    %c0_i32_7 = arith.constant 0 : i32
    %14 = vector.broadcast %c0_i32_7 : i32 to vector<32x8xi32>
    %15 = arith.cmpi slt, %11, %14 : vector<32x8xi32>
    %c0_i32_8 = arith.constant 0 : i32
    %16 = arith.cmpi slt, %9, %c0_i32_8 : i32
    %17 = vector.broadcast %16 : i1 to vector<32x8xi1>
    %18 = vector.broadcast %17 : vector<32x8xi1> to vector<32x8xi1>
    %19 = arith.xori %15, %18 : vector<32x8xi1>
    %20 = arith.andi %19, %13 : vector<32x8xi1>
    %21 = vector.broadcast %9 : i32 to vector<32x8xi32>
    %22 = arith.addi %11, %21 : vector<32x8xi32>
    %23 = arith.select %20, %22, %11 : vector<32x8xi1>, vector<32x8xi32>
    %c0_i32_9 = arith.constant 0 : i32
    %24 = vector.broadcast %c0_i32_9 : i32 to vector<32x8xi32>
    %25 = arith.cmpi eq, %23, %24 : vector<32x8xi32>
    %26 = vector.extract_strided_slice %6 {offsets = [0, 0], sizes = [32, 8], strides = [1, 1]} : vector<32x16xf32> to vector<32x8xf32>
    %27 = vector.extract_strided_slice %6 {offsets = [0, 8], sizes = [32, 8], strides = [1, 1]} : vector<32x16xf32> to vector<32x8xf32>
    %28 = arith.select %25, %26, %27 : vector<32x8xi1>, vector<32x8xf32>
    %cst_10 = arith.constant 0.000000e+00 : f32
    %29 = vector.broadcast %cst_10 : f32 to vector<2x1x16xf32>
    %c0_11 = arith.constant 0 : index
    %c0_12 = arith.constant 0 : index
    %c0_13 = arith.constant 0 : index
    %30 = vector.load %arg9[%c0_11, %c0_12, %c0_13] : memref<2x24x16xf32, #tpu.memory_space<vmem>>, vector<2x1x16xf32>
    tpu.vector_store %arg9[%c0_11, %c0_12, %c0_13], %29 {strides = array<i32>} : memref<2x24x16xf32, #tpu.memory_space<vmem>>, vector<2x1x16xf32>,
    %cst_14 = arith.constant 0.000000e+00 : f32
    %31 = vector.broadcast %cst_14 : f32 to vector<2x7x16xf32>
    %c0_15 = arith.constant 0 : index
    %c17 = arith.constant 17 : index
    %c0_16 = arith.constant 0 : index
    %32 = vector.load %arg9[%c0_15, %c17, %c0_16] : memref<2x24x16xf32, #tpu.memory_space<vmem>>, vector<2x7x16xf32>
    tpu.vector_store %arg9[%c0_15, %c17, %c0_16], %31 {strides = array<i32>} : memref<2x24x16xf32, #tpu.memory_space<vmem>>, vector<2x7x16xf32>,
    %33 = vector.shape_cast %28 : vector<32x8xf32> to vector<2x16x8xf32>
    %c0_17 = arith.constant 0 : index
    %c1 = arith.constant 1 : index
    %c0_18 = arith.constant 0 : index
    %34 = vector.load %arg9[%c0_17, %c1, %c0_18] : memref<2x24x16xf32, #tpu.memory_space<vmem>>, vector<2x16x8xf32>
    tpu.vector_store %arg9[%c0_17, %c1, %c0_18], %33 {strides = array<i32>} : memref<2x24x16xf32, #tpu.memory_space<vmem>>, vector<2x16x8xf32>,
    %c0_19 = arith.constant 0 : index
    %c0_20 = arith.constant 0 : index
    %c0_21 = arith.constant 0 : index
    %35 = vector.load %arg2[%c0_19, %c0_20, %c0_21] : memref<2x16x8xf32, #tpu.memory_space<vmem>>, vector<2x16x8xf32>
    %c0_22 = arith.constant 0 : index
    %c1_23 = arith.constant 1 : index
    %c8 = arith.constant 8 : index
    %36 = vector.load %arg9[%c0_22, %c1_23, %c8] : memref<2x24x16xf32, #tpu.memory_space<vmem>>, vector<2x16x8xf32>
    tpu.vector_store %arg9[%c0_22, %c1_23, %c8], %35 {strides = array<i32>} : memref<2x24x16xf32, #tpu.memory_space<vmem>>, vector<2x16x8xf32>,
    %c0_24 = arith.constant 0 : index
    %c0_25 = arith.constant 0 : index
    %c0_26 = arith.constant 0 : index
    %37 = vector.load %arg9[%c0_24, %c0_25, %c0_26] : memref<2x24x16xf32, #tpu.memory_space<vmem>>, vector<2x16x16xf32>
    %c0_27 = arith.constant 0 : index
    %c1_28 = arith.constant 1 : index
    %c0_29 = arith.constant 0 : index
    %38 = vector.load %arg9[%c0_27, %c1_28, %c0_29] : memref<2x24x16xf32, #tpu.memory_space<vmem>>, vector<2x16x16xf32>
    %c0_30 = arith.constant 0 : index
    %c2 = arith.constant 2 : index
    %c0_31 = arith.constant 0 : index
    %39 = vector.load %arg9[%c0_30, %c2, %c0_31] : memref<2x24x16xf32, #tpu.memory_space<vmem>>, vector<2x16x16xf32>
    %40 = tpu.concatenate %37, %38, %39 in 2 : vector<2x16x16xf32>, vector<2x16x16xf32>, vector<2x16x16xf32> -> vector<2x16x48xf32>
    %41 = vector.shape_cast %40 : vector<2x16x48xf32> to vector<32x48xf32>
    %c0_32 = arith.constant 0 : index
    %c0_33 = arith.constant 0 : index
    %42 = vector.load %arg5[%c0_32, %c0_33] : memref<48x8xf32, #tpu.memory_space<vmem>>, vector<48x8xf32>
    %cst_34 = arith.constant dense<0.000000e+00> : vector<32x8xf32>
    %43 = tpu.matmul %41, %42, %cst_34 {dimension_numbers = #tpu.dot_dimension_numbers<[1], [0], [0], [1], [0, 0, 1, 1], [], []>} : vector<32x48xf32>, vector<48x8xf32>, vector<32x8xf32> -> vector<32x8xf32>
    %c0_35 = arith.constant 0 : index
    %c0_36 = arith.constant 0 : index
    %44 = vector.load %arg6[%c0_35, %c0_36] : memref<1x8xf32, #tpu.memory_space<vmem>>, vector<1x8xf32>
    %45 = vector.broadcast %44 : vector<1x8xf32> to vector<32x8xf32>
    %46 = arith.addf %43, %45 : vector<32x8xf32>
    %47 = vector.shape_cast %46 : vector<32x8xf32> to vector<2x16x8xf32>
    %c0_37 = arith.constant 0 : index
    %c0_38 = arith.constant 0 : index
    %c0_39 = arith.constant 0 : index
    %48 = vector.load %arg7[%c0_37, %c0_38, %c0_39] : memref<2x16x8xf32, #tpu.memory_space<vmem>>, vector<2x16x8xf32>
    tpu.vector_store %arg7[%c0_37, %c0_38, %c0_39], %47 {strides = array<i32>} : memref<2x16x8xf32, #tpu.memory_space<vmem>>, vector<2x16x8xf32>,
    %cst_40 = arith.constant dense<0.000000e+00> : vector<8xf32>
    %49 = vector.multi_reduction <add>, %46, %cst_40 [0] : vector<32x8xf32> to vector<8xf32>
    %50 = vector.shape_cast %49 : vector<8xf32> to vector<1x8xf32>
    %51 = arith.mulf %46, %46 : vector<32x8xf32>
    %cst_41 = arith.constant dense<0.000000e+00> : vector<8xf32>
    %52 = vector.multi_reduction <add>, %51, %cst_41 [0] : vector<32x8xf32> to vector<8xf32>
    %53 = vector.shape_cast %52 : vector<8xf32> to vector<1x8xf32>
    %cst_42 = arith.constant 0.000000e+00 : f32
    %54 = vector.broadcast %cst_42 : f32 to vector<6x8xf32>
    %55 = tpu.concatenate %50, %53, %54 in 0 : vector<1x8xf32>, vector<1x8xf32>, vector<6x8xf32> -> vector<8x8xf32>
    %c0_43 = arith.constant 0 : index
    %c0_44 = arith.constant 0 : index
    %c0_45 = arith.constant 0 : index
    %56 = vector.load %arg8[%c0_43, %c0_44, %c0_45] : memref<1x8x8xf32, #tpu.memory_space<vmem>>, vector<1x8x8xf32>
    %57 = vector.shape_cast %56 : vector<1x8x8xf32> to vector<8x8xf32>
    %58 = vector.shape_cast %55 : vector<8x8xf32> to vector<1x8x8xf32>
    tpu.vector_store %arg8[%c0_43, %c0_44, %c0_45], %58 {strides = array<i32>} : memref<1x8x8xf32, #tpu.memory_space<vmem>>, vector<1x8x8xf32>,
    return
  }
  func.func @transform_0(%arg0: i32) -> (i32, i32, i32) {
    %c0_i32 = arith.constant 0 : i32
    %c0_i32_0 = arith.constant 0 : i32
    %c0_i32_1 = arith.constant 0 : i32
    return %arg0, %c0_i32, %c0_i32_0 : i32, i32, i32
  }
  func.func @transform_1(%arg0: i32) -> (i32, i32, i32) {
    %c0_i32 = arith.constant 0 : i32
    %c0_i32_0 = arith.constant 0 : i32
    %c0_i32_1 = arith.constant 0 : i32
    return %arg0, %c0_i32, %c0_i32_0 : i32, i32, i32
  }
  func.func @transform_2(%arg0: i32) -> (i32, i32) {
    %c0_i32 = arith.constant 0 : i32
    %c0_i32_0 = arith.constant 0 : i32
    %c0_i32_1 = arith.constant 0 : i32
    return %c0_i32, %c0_i32_0 : i32, i32
  }
  func.func @transform_3(%arg0: i32) -> (i32, i32) {
    %c0_i32 = arith.constant 0 : i32
    %c0_i32_0 = arith.constant 0 : i32
    %c0_i32_1 = arith.constant 0 : i32
    return %c0_i32, %c0_i32_0 : i32, i32
  }
  func.func @transform_4(%arg0: i32) -> (i32, i32) {
    %c0_i32 = arith.constant 0 : i32
    %c0_i32_0 = arith.constant 0 : i32
    %c0_i32_1 = arith.constant 0 : i32
    return %c0_i32, %c0_i32_0 : i32, i32
  }
  func.func @transform_5(%arg0: i32) -> (i32, i32) {
    %c0_i32 = arith.constant 0 : i32
    %c0_i32_0 = arith.constant 0 : i32
    %c0_i32_1 = arith.constant 0 : i32
    return %c0_i32, %c0_i32_0 : i32, i32
  }
  func.func @transform_6(%arg0: i32) -> (i32, i32, i32) {
    %c0_i32 = arith.constant 0 : i32
    %c0_i32_0 = arith.constant 0 : i32
    %c0_i32_1 = arith.constant 0 : i32
    return %arg0, %c0_i32, %c0_i32_0 : i32, i32, i32
  }
  func.func @transform_7(%arg0: i32) -> (i32, i32, i32) {
    %c0_i32 = arith.constant 0 : i32
    %c0_i32_0 = arith.constant 0 : i32
    %c0_i32_1 = arith.constant 0 : i32
    return %arg0, %c0_i32, %c0_i32_0 : i32, i32, i32
  }
}

</mosaic_0001>

<llo_original>
// kernel: tpu_custom_call.1
$region0: #{tpu_custom_call.1}
  #allocation0 [shape = 'u32[]', space=smem, size = 0x4, offset = 0x4, fixed_abs, tag = 'smem constant byte address 0x4 - core index']
  #allocation1 [shape = 'u32[144,128]{1,0:T(1,128)}', space=vmem, size = 0x12000, scoped, tag = 'internal scratch']
  #allocation2 [shape = 'f32[2,24,16]{2,1,0:T(8,128)}', space=vmem, size = 0x6000, scoped, tag = 'scratch operand']
  %s0 = inlined_call_operand.vmem [shape: f32[2,16,8], index: 0, kind: input, shape index: {}]
  %s1 = inlined_call_operand.vmem [shape: f32[2,16,8], index: 1, kind: input, shape index: {}]
  %s2 = inlined_call_operand.vmem [shape: f32[8,16], index: 2, kind: input, shape index: {}]
  %s3 = inlined_call_operand.vmem [shape: f32[1,16], index: 3, kind: input, shape index: {}]
  %s4 = inlined_call_operand.vmem [shape: f32[48,8], index: 4, kind: input, shape index: {}]
  %s5 = inlined_call_operand.vmem [shape: f32[1,8], index: 5, kind: input, shape index: {}]
  %s6 = inlined_call_operand.vmem [shape: f32[2,16,8], index: 6, kind: output, shape index: {0}]
  %s7 = inlined_call_operand.hbm [shape: f32[1,8,8], index: 7, kind: output, shape index: {1}]
  %8 = xla_tuple %s6, %s7
  %s9 = sld [smem:[#allocation0]]
  $region42: #{tpu_custom_call.1} parent=0
    _
  %s11 = ssub.s32 1, %s9
  %s12 = scalar_select 0, %s11, %s9
  $region1: #{tpu_custom_call.1} parent=0
    #allocation3 [shape = 'u8[4096]{0}', space=vmem, size = 0x1000, scoped, tag = 'output window, operand 1, single buffered']
    #allocation4 [shape = 's32[1]{0}', space=sflag, size = 0x4, scoped, tag = 'scoped memory for tpu_custom_call.1']
    %13 = vsyncpa [#allocation4], 0
    // Predicated region
    $region2: #{tpu_custom_call.1} parent=1 // pred_check
      _
    $region3: #{tpu_custom_call.1} parent=1 // pred_check_branch
      %15 = sbr.rel (0) target = $region5
    $region4: #{tpu_custom_call.1} parent=1 // pred_region
      _
    $region5: #{tpu_custom_call.1} parent=1 // pred_fallthru
      _
    // Predicated region
    $region6: #{tpu_custom_call.1} parent=1 // pred_check
      _
    $region7: #{tpu_custom_call.1} parent=1 // pred_check_branch
      %17 = sbr.rel (0) target = $region9
    $region8: #{tpu_custom_call.1} parent=1 // pred_region
      _
    $region9: #{tpu_custom_call.1} parent=1 // pred_fallthru
      _
    // Predicated region
    $region10: #{tpu_custom_call.1} parent=1 // pred_check
      _
    $region11: #{tpu_custom_call.1} parent=1 // pred_check_branch
      %19 = sbr.rel (0) target = $region13
    $region12: #{tpu_custom_call.1} parent=1 // pred_region
      _
    $region13: #{tpu_custom_call.1} parent=1 // pred_fallthru
      _
    // Predicated region
    $region14: #{tpu_custom_call.1} parent=1 // pred_check
      _
    $region15: #{tpu_custom_call.1} parent=1 // pred_check_branch
      %21 = sbr.rel (0) target = $region17
    $region16: #{tpu_custom_call.1} parent=1 // pred_region
      _
    $region17: #{tpu_custom_call.1} parent=1 // pred_fallthru
      _
    // Predicated region
    $region18: #{tpu_custom_call.1} parent=1 // pred_check
      _
    $region19: #{tpu_custom_call.1} parent=1 // pred_check_branch
      %23 = sbr.rel (0) target = $region21
    $region20: #{tpu_custom_call.1} parent=1 // pred_region
      _
    $region21: #{tpu_custom_call.1} parent=1 // pred_fallthru
      _
    // Predicated region
    $region22: #{tpu_custom_call.1} parent=1 // pred_check
      _
    $region23: #{tpu_custom_call.1} parent=1 // pred_check_branch
      %25 = sbr.rel (0) target = $region25
    $region24: #{tpu_custom_call.1} parent=1 // pred_region
      _
    $region25: #{tpu_custom_call.1} parent=1 // pred_fallthru
      _
    %v26 = vld [vmem:[%s0] sm:$0xff]
    %v27 = vld [vmem:[%s0 + $0x8] sm:$0xff]
    %v28 = vld [vmem:[%s0 + $0x10] sm:$0xff]
    %v29 = vld [vmem:[%s0 + $0x18] sm:$0xff]
    %v30 = vld [vmem:[%s2] sm:$0xff]
    %v31 = vld [vmem:[%s3] sm:$0x1]
    %v33 = vlaneseq
    %v34 = vshrl.u32 %v33, 7
    %v35 = vsub.s32 0, %v34
    %v36 = vrot.slane %v31, %v35
    %vm38 = vcmask 64512
    %v40 = vsel %vm38, %v26, 0
    %v43 = vsel %vm38, %v27, 0
    %v46 = vsel %vm38, %v28, 0
    %v49 = vsel %vm38, %v29, 0
    %51 = vmatprep.subr.mxu0 0.0
    %52 = vmatpush1.msra.mxu0 0.0
    %53 = vmatprep.subr.mxu0 0.0
    %54 = vmatpush1.msra.mxu0 0.0
    %55 = vmatprep.subr.mxu0 0.0
    %56 = vmatpush1.msra.mxu0 0.0
    %57 = vmatprep.subr.mxu0 0.0
    %58 = vmatpush1.msra.mxu0 0.0
    %59 = vmatprep.subr.mxu0 0.0
    %60 = vmatpush1.msra.mxu0 0.0
    %61 = vmatprep.subr.mxu0 0.0
    %62 = vmatpush1.msra.mxu0 0.0
    %63 = vmatprep.subr.mxu0 0.0
    %64 = vmatpush1.msra.mxu0 0.0
    %65 = vmatprep.subr.mxu0 0.0
    %66 = vmatpush1.msra.mxu0 0.0
    %67 = vmatprep.subr.mxu0 0.0
    %68 = vmatpush1.msra.mxu0 0.0
    %69 = vmatprep.subr.mxu0 0.0
    %70 = vmatpush1.msra.mxu0 0.0
    %71 = vmatprep.subr.mxu0 0.0
    %72 = vmatpush1.msra.mxu0 0.0
    %73 = vmatprep.subr.mxu0 0.0
    %74 = vmatpush1.msra.mxu0 0.0
    %75 = vmatprep.subr.mxu0 0.0
    %76 = vmatpush1.msra.mxu0 0.0
    %77 = vmatprep.subr.mxu0 0.0
    %78 = vmatpush1.msra.mxu0 0.0
    %79 = vmatprep.subr.mxu0 0.0
    %80 = vmatpush1.msra.mxu0 0.0
    %81 = vmatprep.subr.mxu0 0.0
    %82 = vmatpush1.msra.mxu0 %v30
    %83 = vmatprep.subr.mxu0 0.0
    %84 = vmatpush2.msra.mxu0 0.0
    %85 = vmatprep.subr.mxu0 0.0
    %86 = vmatpush2.msra.mxu0 0.0
    %87 = vmatprep.subr.mxu0 0.0
    %88 = vmatpush2.msra.mxu0 0.0
    %89 = vmatprep.subr.mxu0 0.0
    %90 = vmatpush2.msra.mxu0 0.0
    %91 = vmatprep.subr.mxu0 0.0
    %92 = vmatpush2.msra.mxu0 0.0
    %93 = vmatprep.subr.mxu0 0.0
    %94 = vmatpush2.msra.mxu0 0.0
    %95 = vmatprep.subr.mxu0 0.0
    %96 = vmatpush2.msra.mxu0 0.0
    %97 = vmatprep.subr.mxu0 0.0
    %98 = vmatpush2.msra.mxu0 0.0
    %99 = vmatprep.subr.mxu0 0.0
    %100 = vmatpush2.msra.mxu0 0.0
    %101 = vmatprep.subr.mxu0 0.0
    %102 = vmatpush2.msra.mxu0 0.0
    %103 = vmatprep.subr.mxu0 0.0
    %104 = vmatpush2.msra.mxu0 0.0
    %105 = vmatprep.subr.mxu0 0.0
    %106 = vmatpush2.msra.mxu0 0.0
    %107 = vmatprep.subr.mxu0 0.0
    %108 = vmatpush2.msra.mxu0 0.0
    %109 = vmatprep.subr.mxu0 0.0
    %110 = vmatpush2.msra.mxu0 0.0
    %111 = vmatprep.subr.mxu0 0.0
    %112 = vmatpush2.msra.mxu0 0.0
    %113 = vmatprep.subr.mxu0 0.0
    %114 = vmatpush2.msra.mxu0 0.0
    %115 = vmatprep.mubr.f32.mxu0 0.0
    %116 = vmatmul.mubr.f32.gmra.mxu0 %v40
    %v117 = vpop.f32.mrf.mxu0
    %v118 = vadd.f32 %v36, %v117
    %v119 = vpop.f32.mrf.mxu0
    %120 = vmatprep.mubr.f32.mxu0 0.0
    %121 = vmatmul.mubr.f32.gmra.mxu0 %v43
    %v122 = vpop.f32.mrf.mxu0
    %v123 = vadd.f32 %v36, %v122
    %v124 = vpop.f32.mrf.mxu0
    %125 = vmatprep.mubr.f32.mxu0 0.0
    %126 = vmatmul.mubr.f32.gmra.mxu0 %v46
    %v127 = vpop.f32.mrf.mxu0
    %v128 = vadd.f32 %v36, %v127
    %v129 = vpop.f32.mrf.mxu0
    %130 = vmatprep.mubr.f32.mxu0 0.0
    %131 = vmatmul.mubr.f32.gmra.mxu0 %v49
    %v132 = vpop.f32.mrf.mxu0
    %v133 = vadd.f32 %v36, %v132
    %v134 = vpop.f32.mrf.mxu0
    %135 = vdwg.mxu0
    %v136 = vlaneseq
    %v137 = vshrl.u32 %v136, 7
    %v138 = vadd.s32 %v137, 8
    %v139 = vadd.s32 %v137, 16
    %v140 = vadd.s32 %v137, 24
    %vm141 = vcmp.lt.s32.totalorder %v137, 0
    %v142 = vsub.s32 0, %v137
    %v143 = vsel %vm141, %v142, %v137
    %v144 = vshrl.u32 %v143, 1
    %v145 = vand.u32 %v143, 1
    %v146 = vsub.s32 0, %v145
    %v147 = vsel %vm141, %v146, %v145
    %vm148 = vcmp.lt.s32.totalorder %v138, 0
    %v149 = vsub.s32 0, %v138
    %v150 = vsel %vm148, %v149, %v138
    %v151 = vshrl.u32 %v150, 1
    %v152 = vand.u32 %v150, 1
    %v153 = vsub.s32 0, %v152
    %v154 = vsel %vm148, %v153, %v152
    %vm155 = vcmp.lt.s32.totalorder %v139, 0
    %v156 = vsub.s32 0, %v139
    %v157 = vsel %vm155, %v156, %v139
    %v158 = vshrl.u32 %v157, 1
    %v159 = vand.u32 %v157, 1
    %v160 = vsub.s32 0, %v159
    %v161 = vsel %vm155, %v160, %v159
    %vm162 = vcmp.lt.s32.totalorder %v140, 0
    %v163 = vsub.s32 0, %v140
    %v164 = vsel %vm162, %v163, %v140
    %v165 = vshrl.u32 %v164, 1
    %v166 = vand.u32 %v164, 1
    %v167 = vsub.s32 0, %v166
    %v168 = vsel %vm162, %v167, %v166
    %vm169 = vcmp.ne.s32.totalorder %v147, 0
    %vm170 = vcmp.ne.s32.totalorder %v154, 0
    %vm171 = vcmp.ne.s32.totalorder %v161, 0
    %vm172 = vcmp.ne.s32.totalorder %v168, 0
    %vm173 = vcmp.lt.s32.totalorder %v147, 0
    %vm174 = vcmp.lt.s32.totalorder %v154, 0
    %vm175 = vcmp.lt.s32.totalorder %v161, 0
    %vm176 = vcmp.lt.s32.totalorder %v168, 0
    %vm177 = vmand %vm173, %vm169
    %vm178 = vmand %vm174, %vm170
    %vm179 = vmand %vm175, %vm171
    %vm180 = vmand %vm176, %vm172
    %v181 = vadd.s32 %v147, 2
    %v182 = vadd.s32 %v154, 2
    %v183 = vadd.s32 %v161, 2
    %v184 = vadd.s32 %v168, 2
    %v185 = vsel %vm177, %v181, %v147
    %v186 = vsel %vm178, %v182, %v154
    %v187 = vsel %vm179, %v183, %v161
    %v188 = vsel %vm180, %v184, %v168
    %vm189 = vcmp.eq.s32.totalorder %v185, 0
    %vm190 = vcmp.eq.s32.totalorder %v186, 0
    %vm191 = vcmp.eq.s32.totalorder %v187, 0
    %vm192 = vcmp.eq.s32.totalorder %v188, 0
    %197 = vrot.lane.b32.xlu0 %v118, 120
    %v198 = vpop.permute.xlu0 %197
    %199 = vrot.lane.b32.xlu0 %v123, 120
    %v200 = vpop.permute.xlu0 %199
    %201 = vrot.lane.b32.xlu0 %v128, 120
    %v202 = vpop.permute.xlu0 %201
    %203 = vrot.lane.b32.xlu0 %v133, 120
    %v204 = vpop.permute.xlu0 %203
    %v209 = vsel %vm189, %v118, %v198
    %v210 = vsel %vm190, %v123, %v200
    %v211 = vsel %vm191, %v128, %v202
    %v212 = vsel %vm192, %v133, %v204
    %vm213 = vcmask 122880
    %214 = vst.msk [vmem:[#allocation2] sm:$0x1] %vm213, 0.0
    %215 = vst.msk [vmem:[#allocation2 + $0x18] sm:$0x1] %vm213, 0.0
    %vm216 = vcmask 129024
    %217 = vst.msk [vmem:[#allocation2 + $0x11] sm:$0x7f] %vm216, 0.0
    %218 = vst.msk [vmem:[#allocation2 + $0x29] sm:$0x7f] %vm216, 0.0
    %219 = vst.msk [vmem:[#allocation2 + $0x1] sm:$0xff] %vm38, %v209
    %220 = vst.msk [vmem:[#allocation2 + $0x9] sm:$0xff] %vm38, %v210
    %221 = vst.msk [vmem:[#allocation2 + $0x19] sm:$0xff] %vm38, %v211
    %222 = vst.msk [vmem:[#allocation2 + $0x21] sm:$0xff] %vm38, %v212
    %v223 = vld [vmem:[%s1] sm:$0xff]
    %v224 = vld [vmem:[%s1 + $0x8] sm:$0xff]
    %v225 = vld [vmem:[%s1 + $0x10] sm:$0xff]
    %v226 = vld [vmem:[%s1 + $0x18] sm:$0xff]
    %231 = vrot.lane.b32.xlu0 %v223, 8
    %v232 = vpop.permute.xlu0 %231
    %233 = vrot.lane.b32.xlu0 %v224, 8
    %v234 = vpop.permute.xlu0 %233
    %235 = vrot.lane.b32.xlu0 %v225, 8
    %v236 = vpop.permute.xlu0 %235
    %237 = vrot.lane.b32.xlu0 %v226, 8
    %v238 = vpop.permute.xlu0 %237
    %vm243 = vcmask 130112
    %244 = vst.msk [vmem:[#allocation2 + $0x1] sm:$0xff] %vm243, %v232
    %245 = vst.msk [vmem:[#allocation2 + $0x9] sm:$0xff] %vm243, %v234
    %246 = vst.msk [vmem:[#allocation2 + $0x19] sm:$0xff] %vm243, %v236
    %247 = vst.msk [vmem:[#allocation2 + $0x21] sm:$0xff] %vm243, %v238
    %v248 = vld [vmem:[#allocation2] sm:$0xff]
    %v249 = vld [vmem:[#allocation2 + $0x8] sm:$0xff]
    %v250 = vld [vmem:[#allocation2 + $0x18] sm:$0xff]
    %v251 = vld [vmem:[#allocation2 + $0x20] sm:$0xff]
    %v252 = vld [vmem:[#allocation2 + $0x1] sm:$0xff]
    %v253 = vld [vmem:[#allocation2 + $0x9] sm:$0xff]
    %v254 = vld [vmem:[#allocation2 + $0x19] sm:$0xff]
    %v255 = vld [vmem:[#allocation2 + $0x21] sm:$0xff]
    %v256 = vld [vmem:[#allocation2 + $0x2] sm:$0xff]
    %v257 = vld [vmem:[#allocation2 + $0xa] sm:$0xff]
    %v258 = vld [vmem:[#allocation2 + $0x1a] sm:$0xff]
    %v259 = vld [vmem:[#allocation2 + $0x22] sm:$0xff]
    %264 = vrot.lane.b32.xlu0 %v252, 16
    %v265 = vpop.permute.xlu0 %264
    %266 = vrot.lane.b32.xlu0 %v253, 16
    %v267 = vpop.permute.xlu0 %266
    %268 = vrot.lane.b32.xlu0 %v254, 16
    %v269 = vpop.permute.xlu0 %268
    %270 = vrot.lane.b32.xlu0 %v255, 16
    %v271 = vpop.permute.xlu0 %270
    %280 = vrot.lane.b32.xlu0 %v256, 32
    %v281 = vpop.permute.xlu0 %280
    %282 = vrot.lane.b32.xlu0 %v257, 32
    %v283 = vpop.permute.xlu0 %282
    %284 = vrot.lane.b32.xlu0 %v258, 32
    %v285 = vpop.permute.xlu0 %284
    %286 = vrot.lane.b32.xlu0 %v259, 32
    %v287 = vpop.permute.xlu0 %286
    %vm292 = vcmask 130048
    %v293 = vsel %vm292, %v248, %v265
    %v294 = vsel %vm292, %v249, %v267
    %v295 = vsel %vm292, %v250, %v269
    %v296 = vsel %vm292, %v251, %v271
    %vm297 = vcmask 261120
    %v298 = vsel %vm297, %v293, %v281
    %v299 = vsel %vm297, %v294, %v283
    %v300 = vsel %vm297, %v295, %v285
    %v301 = vsel %vm297, %v296, %v287
    %v302 = vld [vmem:[%s4] sm:$0xff]
    %v303 = vld [vmem:[%s4 + $0x8] sm:$0xff]
    %v304 = vld [vmem:[%s4 + $0x10] sm:$0xff]
    %v305 = vld [vmem:[%s4 + $0x18] sm:$0xff]
    %v306 = vld [vmem:[%s4 + $0x20] sm:$0xff]
    %v307 = vld [vmem:[%s4 + $0x28] sm:$0xff]
    %v308 = vld [vmem:[%s5] sm:$0x1]
    %v310 = vlaneseq
    %v311 = vshrl.u32 %v310, 7
    %v312 = vsub.s32 0, %v311
    %v313 = vrot.slane %v308, %v312
    %vm315 = vcmask 392192
    %v317 = vsel %vm315, %v298, 0
    %v320 = vsel %vm315, %v299, 0
    %v323 = vsel %vm315, %v300, 0
    %v326 = vsel %vm315, %v301, 0
    %328 = vmatprep.subr.mxu0 0.0
    %329 = vmatpush1.msra.mxu0 0.0
    %330 = vmatprep.subr.mxu0 0.0
    %331 = vmatpush1.msra.mxu0 0.0
    %332 = vmatprep.subr.mxu0 0.0
    %333 = vmatpush1.msra.mxu0 0.0
    %334 = vmatprep.subr.mxu0 0.0
    %335 = vmatpush1.msra.mxu0 0.0
    %336 = vmatprep.subr.mxu0 0.0
    %337 = vmatpush1.msra.mxu0 0.0
    %338 = vmatprep.subr.mxu0 0.0
    %339 = vmatpush1.msra.mxu0 0.0
    %340 = vmatprep.subr.mxu0 0.0
    %341 = vmatpush1.msra.mxu0 0.0
    %342 = vmatprep.subr.mxu0 0.0
    %343 = vmatpush1.msra.mxu0 0.0
    %344 = vmatprep.subr.mxu0 0.0
    %345 = vmatpush1.msra.mxu0 0.0
    %346 = vmatprep.subr.mxu0 0.0
    %347 = vmatpush1.msra.mxu0 0.0
    %348 = vmatprep.subr.mxu0 0.0
    %349 = vmatpush1.msra.mxu0 %v307
    %350 = vmatprep.subr.mxu0 0.0
    %351 = vmatpush1.msra.mxu0 %v306
    %352 = vmatprep.subr.mxu0 0.0
    %353 = vmatpush1.msra.mxu0 %v305
    %354 = vmatprep.subr.mxu0 0.0
    %355 = vmatpush1.msra.mxu0 %v304
    %356 = vmatprep.subr.mxu0 0.0
    %357 = vmatpush1.msra.mxu0 %v303
    %358 = vmatprep.subr.mxu0 0.0
    %359 = vmatpush1.msra.mxu0 %v302
    %360 = vmatprep.subr.mxu0 0.0
    %361 = vmatpush2.msra.mxu0 0.0
    %362 = vmatprep.subr.mxu0 0.0
    %363 = vmatpush2.msra.mxu0 0.0
    %364 = vmatprep.subr.mxu0 0.0
    %365 = vmatpush2.msra.mxu0 0.0
    %366 = vmatprep.subr.mxu0 0.0
    %367 = vmatpush2.msra.mxu0 0.0
    %368 = vmatprep.subr.mxu0 0.0
    %369 = vmatpush2.msra.mxu0 0.0
    %370 = vmatprep.subr.mxu0 0.0
    %371 = vmatpush2.msra.mxu0 0.0
    %372 = vmatprep.subr.mxu0 0.0
    %373 = vmatpush2.msra.mxu0 0.0
    %374 = vmatprep.subr.mxu0 0.0
    %375 = vmatpush2.msra.mxu0 0.0
    %376 = vmatprep.subr.mxu0 0.0
    %377 = vmatpush2.msra.mxu0 0.0
    %378 = vmatprep.subr.mxu0 0.0
    %379 = vmatpush2.msra.mxu0 0.0
    %380 = vmatprep.subr.mxu0 0.0
    %381 = vmatpush2.msra.mxu0 0.0
    %382 = vmatprep.subr.mxu0 0.0
    %383 = vmatpush2.msra.mxu0 0.0
    %384 = vmatprep.subr.mxu0 0.0
    %385 = vmatpush2.msra.mxu0 0.0
    %386 = vmatprep.subr.mxu0 0.0
    %387 = vmatpush2.msra.mxu0 0.0
    %388 = vmatprep.subr.mxu0 0.0
    %389 = vmatpush2.msra.mxu0 0.0
    %390 = vmatprep.subr.mxu0 0.0
    %391 = vmatpush2.msra.mxu0 0.0
    %392 = vmatprep.mubr.f32.mxu0 0.0
    %393 = vmatmul.mubr.f32.gmra.mxu0 %v317
    %v394 = vpop.f32.mrf.mxu0
    %v395 = vadd.f32 %v313, %v394
    %v396 = vpop.f32.mrf.mxu0
    %397 = vmatprep.mubr.f32.mxu0 0.0
    %398 = vmatmul.mubr.f32.gmra.mxu0 %v320
    %v399 = vpop.f32.mrf.mxu0
    %v400 = vadd.f32 %v313, %v399
    %v401 = vpop.f32.mrf.mxu0
    %402 = vmatprep.mubr.f32.mxu0 0.0
    %403 = vmatmul.mubr.f32.gmra.mxu0 %v323
    %v404 = vpop.f32.mrf.mxu0
    %v405 = vadd.f32 %v313, %v404
    %v406 = vpop.f32.mrf.mxu0
    %407 = vmatprep.mubr.f32.mxu0 0.0
    %408 = vmatmul.mubr.f32.gmra.mxu0 %v326
    %v409 = vpop.f32.mrf.mxu0
    %v410 = vadd.f32 %v313, %v409
    %v411 = vpop.f32.mrf.mxu0
    %412 = vdwg.mxu0
    %413 = vst.msk [vmem:[%s6] sm:$0xff] %vm38, %v395
    %414 = vst.msk [vmem:[%s6 + $0x8] sm:$0xff] %vm38, %v400
    %415 = vst.msk [vmem:[%s6 + $0x10] sm:$0xff] %vm38, %v405
    %416 = vst.msk [vmem:[%s6 + $0x18] sm:$0xff] %vm38, %v410
    %v417 = vsel %vm38, %v395, 0.0
    %v418 = vsel %vm38, %v400, 0.0
    %v419 = vadd.f32 %v417, %v418
    %v420 = vsel %vm38, %v405, 0.0
    %v421 = vadd.f32 %v419, %v420
    %v422 = vsel %vm38, %v410, 0.0
    %v423 = vadd.f32 %v421, %v422
    %v424 = vrot.slane %v423, 4
    %v425 = vadd.f32 %v423, %v424
    %v426 = vrot.slane %v425, 2
    %v427 = vadd.f32 %v425, %v426
    %v428 = vrot.slane %v427, 1
    %v429 = vadd.f32 %v427, %v428
    %v430 = vmul.f32 %v395, %v395
    %v431 = vmul.f32 %v400, %v400
    %v432 = vmul.f32 %v405, %v405
    %v433 = vmul.f32 %v410, %v410
    %v434 = vsel %vm38, %v430, 0.0
    %v435 = vsel %vm38, %v431, 0.0
    %v436 = vadd.f32 %v434, %v435
    %v437 = vsel %vm38, %v432, 0.0
    %v438 = vadd.f32 %v436, %v437
    %v439 = vsel %vm38, %v433, 0.0
    %v440 = vadd.f32 %v438, %v439
    %v441 = vrot.slane %v440, 4
    %v442 = vadd.f32 %v440, %v441
    %v443 = vrot.slane %v442, 2
    %v444 = vadd.f32 %v442, %v443
    %v445 = vrot.slane %v444, 1
    %v446 = vadd.f32 %v444, %v445
    %vm447 = vcmask 1040384
    %v448 = vsel %vm447, %v429, %v446
    %vm449 = vcmask 1041408
    %v450 = vsel %vm449, %v448, 0.0
    %451 = vst.msk [vmem:[#allocation3] sm:$0xff] %vm38, %v450
    // Predicated region
    $region26: #{tpu_custom_call.1} parent=1 // pred_check
      _
    $region27: #{tpu_custom_call.1} parent=1 // pred_check_branch
      %453 = sbr.rel (0) target = $region29
    $region28: #{tpu_custom_call.1} parent=1 // pred_region
      _
    $region29: #{tpu_custom_call.1} parent=1 // pred_fallthru
      _
    // Predicated region
    $region30: #{tpu_custom_call.1} parent=1 // pred_check
      _
    $region31: #{tpu_custom_call.1} parent=1 // pred_check_branch
      %455 = sbr.rel (0) target = $region33
    $region32: #{tpu_custom_call.1} parent=1 // pred_region
      %s457 = ssub.s32 128, 128
      %458 = vsyncadd [#allocation4], %s457
      %s460 = sshll.u32 [#allocation3], 4
      %s461 = int_to_ptr.vmem [resolvable:$true] %s460
      %463 = dma.vmem_to_hbm [thread:$0]  %s461, 128, %s7, [#allocation4]
    $region33: #{tpu_custom_call.1} parent=1 // pred_fallthru
      _
    // Predicated region
    $region34: #{tpu_custom_call.1} parent=1 // pred_check
      _
    $region35: #{tpu_custom_call.1} parent=1 // pred_check_branch
      %465 = sbr.rel (0) target = $region37
    $region36: #{tpu_custom_call.1} parent=1 // pred_region
      _
    $region37: #{tpu_custom_call.1} parent=1 // pred_fallthru
      _
    // Predicated region
    $region38: #{tpu_custom_call.1} parent=1 // pred_check
      _
    $region39: #{tpu_custom_call.1} parent=1 // pred_check_branch
      %467 = sbr.rel (0) target = $region41
    $region40: #{tpu_custom_call.1} parent=1 // pred_region
      %468 = dma.done [#allocation4], 128
    $region41: #{tpu_custom_call.1} parent=1 // pred_fallthru
      _
    %469 = vsyncpa [#allocation4], 1

</llo_original>
